<compile_context>
chip_gen: v5e
topology: v5e:2x2
jax: 0.10.0
libtpu: 0.0.40
codegen_flags: <defaults>
</compile_context>

<pallas_src>
import functools
import math

import jax
import jax.numpy as jnp
from jax.experimental import pallas as pl
from jax.experimental.pallas import tpu as pltpu


def _idiv(a, d: int):
    """Integer divide by a static divisor; shift when d is a power of two."""
    if d & (d - 1) == 0:
        return a >> (d.bit_length() - 1)
    return a // d


def _imod(a, d: int):
    """Integer modulo by a static divisor; bitwise-and when d is a power of two."""
    if d & (d - 1) == 0:
        return a & (d - 1)
    return a % d


def dynamic_block_kernel(
    x_ref,        # (B*S, D)       f32
    wqkv_ref,     # (D, 3D)        bf16, packed [Wq | Wk | Wv] (1/sqrt(hd) folded into Wq)
    bqkv_ref,     # (1, 3D)        f32
    wfused_ref,   # (D, hidden)    bf16, fused out_proj∘linear1 weight (Wo^T @ W1^T)
    bfused_ref,   # (1, hidden)    f32,  fused bias (bo @ W1^T + b1)
    o_ref,        # (B*S, hidden)  f32
    *,
    batch: int,
    seq_len: int,
    num_heads: int,
):
    BS, D = x_ref.shape
    H = num_heads
    hd = D // H
    S = seq_len
    C = H * BS            # expanded key axis: head-major, BS keys per head (8*16 = 128 lanes)

    xb = x_ref[...].astype(jnp.bfloat16)

    # ---- Fused QKV projection: one lane-dense MXU matmul, f32 accumulation. ----
    qkv = jnp.dot(xb, wqkv_ref[...], preferred_element_type=jnp.float32) + bqkv_ref[...]
    q = qkv[:, 0:D]               # attention scale already folded into Wq / bq
    k = qkv[:, D:2 * D]
    v = qkv[:, 2 * D:3 * D]

    # ---- Block-diagonal expanded K:  K_exp[d, h*BS+j] = k[j, d] if d in head h ----
    # Tile k^T across the H head segments with a 0/1 selector matmul (MXU slot;
    # avoids a lane-axis reshape/concat relayout), then zero the off-head rows.
    jj = jax.lax.broadcasted_iota(jnp.int32, (BS, C), 0)
    cc = jax.lax.broadcasted_iota(jnp.int32, (BS, C), 1)
    tile_sel = (_imod(cc, BS) == jj).astype(jnp.bfloat16)               # (BS, C)
    k_tiled = jnp.dot(k.T.astype(jnp.bfloat16), tile_sel,
                      preferred_element_type=jnp.float32)               # (D, C) = k[c%BS, d]
    dd = jax.lax.broadcasted_iota(jnp.int32, (D, C), 0)
    dc = jax.lax.broadcasted_iota(jnp.int32, (D, C), 1)
    k_exp = jnp.where(_idiv(dd, hd) == _idiv(dc, BS),
                      k_tiled, 0.0).astype(jnp.bfloat16)                 # (D, C)

    # ---- Scores: one (BS, D) @ (D, C) matmul; column block h holds q_h @ k_h^T. ----
    s = jnp.dot(q.astype(jnp.bfloat16), k_exp, preferred_element_type=jnp.float32)

    if batch > 1:
        # Keep the `batch` sequences independent inside every head segment.
        qi = jax.lax.broadcasted_iota(jnp.int32, (BS, C), 0)
        kc = jax.lax.broadcasted_iota(jnp.int32, (BS, C), 1)
        same_batch = _idiv(qi, S) == _idiv(_imod(kc, BS), S)
        s = jnp.where(same_batch, s, jnp.float32(-1e30))

    # ---- Per-head softmax. ----
    # Subtracting the GLOBAL row max (instead of per-head maxes) leaves each head's
    # softmax mathematically unchanged, is overflow-safe, and needs one lane
    # reduction instead of 8 segmented ones.
    m = jnp.max(s, axis=-1, keepdims=True)
    e = jnp.exp(s - m)                                 # masked entries -> exactly 0
    e_b = e.astype(jnp.bfloat16)

    # ---- Head-batched context + denominators: two (BS, C) @ (C, D) matmuls. ----
    # V_exp[h*BS+j, d] = v[j, d] if d in head h else 0; `sel` is the same 0/1
    # pattern, so e @ sel yields each head's softmax denominator already broadcast
    # across that head's ctx lanes.
    rr = jax.lax.broadcasted_iota(jnp.int32, (C, D), 0)
    rd = jax.lax.broadcasted_iota(jnp.int32, (C, D), 1)
    head_match = _idiv(rr, BS) == _idiv(rd, hd)                          # (C, D)
    v_tiled = jnp.concatenate([v] * H, axis=0)                           # (C, D) sublane concat
    v_exp = jnp.where(head_match, v_tiled, 0.0).astype(jnp.bfloat16)     # (C, D)
    sel_b = head_match.astype(jnp.bfloat16)                              # (C, D)

    ctx_un = jnp.dot(e_b, v_exp, preferred_element_type=jnp.float32)     # (BS, D)
    denom = jnp.dot(e_b, sel_b, preferred_element_type=jnp.float32)      # (BS, D)
    ctx = ctx_un * pl.reciprocal(denom, approx=True)                     # heads concat'd

    # ---- Fused out_proj ∘ linear1 (no nonlinearity between them): one matmul. ----
    y = jnp.dot(ctx.astype(jnp.bfloat16), wfused_ref[...],
                preferred_element_type=jnp.float32) + bfused_ref[...]
    o_ref[...] = y.astype(o_ref.dtype)


def dynamic_block_forward(x, static_data, params, *, num_heads=8):
    """x: (B, S, D) float32.  static_data accepted for API parity (unused)."""
    del static_data  # TODO(synk): reference forward() never uses static_data
    B, S, D = x.shape
    hidden = params["bfused"].shape[-1]
    BS = B * S
    C = num_heads * BS

    x2 = x.reshape(BS, D)   # flatten outside the kernel (free at XLA level)

    operands = (x2, params["wqkv_t"], params["bqkv"],
                params["wfused_t"], params["bfused"])

    flops = 2 * BS * D * 3 * D          # fused QKV projection
    flops += 2 * D * BS * C             # K tiling selector matmul
    flops += 2 * BS * D * C             # scores
    flops += 2 * 2 * BS * C * D         # ctx + denominators
    flops += 2 * BS * D * hidden        # fused out_proj∘linear1
    bytes_accessed = sum(int(a.size) * a.dtype.itemsize for a in operands) + BS * hidden * 4

    vmem = pltpu.MemorySpace.VMEM
    out = pl.pallas_call(
        functools.partial(dynamic_block_kernel, batch=B, seq_len=S, num_heads=num_heads),
        out_shape=jax.ShapeDtypeStruct((BS, hidden), jnp.float32),
        in_specs=[pl.BlockSpec(memory_space=vmem) for _ in operands],
        out_specs=pl.BlockSpec(memory_space=vmem),
        cost_estimate=pl.CostEstimate(flops=int(flops),
                                      transcendentals=int(BS * C),
                                      bytes_accessed=int(bytes_accessed)),
    )(*operands)
    return out.reshape(B, S, hidden)


def make_params(key, input_dim, hidden_dim, num_heads):
    """Deterministic synthetic parameters matching nn.MultiheadAttention + nn.Linear shapes."""
    D, H = input_dim, num_heads
    hd = D // H
    ks = jax.random.split(key, 6)
    std = 0.05
    # nn.MultiheadAttention packed in_proj: (3D, D) weight, (3D,) bias
    Wqkv = jax.random.normal(ks[0], (3 * D, D), jnp.float32) * std
    bqkv = jax.random.normal(ks[1], (3 * D,), jnp.float32) * std
    Wo = jax.random.normal(ks[2], (D, D), jnp.float32) * std            # out_proj weight
    bo = jax.random.normal(ks[3], (D,), jnp.float32) * std
    W1 = jax.random.normal(ks[4], (hidden_dim, D), jnp.float32) * std   # linear1 weight
    b1 = jax.random.normal(ks[5], (hidden_dim,), jnp.float32) * std

    # Fold the 1/sqrt(head_dim) attention scale into the Q projection (zero-cost).
    scale = 1.0 / math.sqrt(hd)
    Wqkv = Wqkv.at[:D].multiply(scale)
    bqkv = bqkv.at[:D].multiply(scale)

    # Algebraic fusion of out_proj and linear1 (dropout is eval-identity, no
    # nonlinearity between them):
    #   y = (ctx @ Wo^T + bo) @ W1^T + b1 = ctx @ (Wo^T W1^T) + (bo W1^T + b1)
    # Fused in f32; cast to bf16 only at the end to avoid compounding rounding.
    Wf = Wo.T @ W1.T                     # (D, hidden)
    bf = bo @ W1.T + b1                  # (hidden,)

    return {
        # y = x @ Wqkv^T + bqkv  -> pack transposed, lane-dense, bf16 for the MXU.
        "wqkv_t": Wqkv.T.astype(jnp.bfloat16),       # (D, 3D)
        "bqkv": bqkv.reshape(1, 3 * D),              # f32
        "wfused_t": Wf.astype(jnp.bfloat16),         # (D, hidden)
        "bfused": bf.reshape(1, hidden_dim),         # f32
    }


def _reference_forward(x, params, *, num_heads):
    """Pure-JAX f32 reference (same packed weights) for a numerical sanity check."""
    B, S, D = x.shape
    H = num_heads
    hd = D // H
    x2 = x.reshape(B * S, D)
    qkv = x2 @ params["wqkv_t"].astype(jnp.float32) + params["bqkv"]
    q = qkv[:, :D].reshape(B, S, H, hd)
    k = qkv[:, D:2 * D].reshape(B, S, H, hd)
    v = qkv[:, 2 * D:].reshape(B, S, H, hd)
    s = jnp.einsum("bqhd,bkhd->bhqk", q, k)          # scale already folded into q
    p = jax.nn.softmax(s, axis=-1)
    ctx = jnp.einsum("bhqk,bkhd->bqhd", p, v).reshape(B * S, D)
    y = ctx @ params["wfused_t"].astype(jnp.float32) + params["bfused"]
    return y.reshape(B, S, -1)


if __name__ == "__main__":
    # Small shapes consistent with the module: embed dim divisible by 8 heads.
    B, S = 2, 8
    input_dim, hidden_dim, output_dim, static_dim = 32, 32, 32, 4
    num_heads = 8

    key = jax.random.PRNGKey(0)
    kx, ksd, kp = jax.random.split(key, 3)
    x = jax.random.normal(kx, (B, S, input_dim), jnp.float32)
    static_data = jax.random.normal(ksd, (B, static_dim), jnp.float32)

    params = make_params(kp, input_dim, hidden_dim, num_heads)

    out = dynamic_block_forward(x, static_data, params, num_heads=num_heads)
    out = jax.block_until_ready(out)
    assert out.shape == (B, S, hidden_dim), out.shape
    assert jnp.all(jnp.isfinite(out))

    # Loose tolerance: kernel uses bf16 MXU operands + approx reciprocal.
    ref = _reference_forward(x, params, num_heads=num_heads)
    err = float(jnp.max(jnp.abs(out - ref)))
    assert jnp.allclose(out, ref, atol=2e-2, rtol=2e-1), err

    print("KERNEL_OK")
</pallas_src>

<mosaic_0001>
module attributes {stable_mosaic.version = 11 : i64} {
  func.func @dynamic_block_kernel(%arg0: memref<16x32xf32, #tpu.memory_space<vmem>>, %arg1: memref<32x96xbf16, #tpu.memory_space<vmem>>, %arg2: memref<1x96xf32, #tpu.memory_space<vmem>>, %arg3: memref<32x32xbf16, #tpu.memory_space<vmem>>, %arg4: memref<1x32xf32, #tpu.memory_space<vmem>>, %arg5: memref<16x32xf32, #tpu.memory_space<vmem>>) attributes {dimension_semantics = [], scalar_prefetch = 0 : i64, scratch_operands = 0 : i64, tpu.core_type = #tpu.core_type<tc>} {
    %c0 = arith.constant 0 : index
    %c0_0 = arith.constant 0 : index
    %0 = vector.load %arg0[%c0, %c0_0] : memref<16x32xf32, #tpu.memory_space<vmem>>, vector<16x32xf32>
    %1 = arith.truncf %0 : vector<16x32xf32> to vector<16x32xbf16>
    %c0_1 = arith.constant 0 : index
    %c0_2 = arith.constant 0 : index
    %2 = vector.load %arg1[%c0_1, %c0_2] : memref<32x96xbf16, #tpu.memory_space<vmem>>, vector<32x96xbf16>
    %cst = arith.constant dense<0.000000e+00> : vector<16x96xf32>
    %3 = tpu.matmul %1, %2, %cst {dimension_numbers = #tpu.dot_dimension_numbers<[1], [0], [0], [1], [0, 0, 1, 1], [], []>} : vector<16x32xbf16>, vector<32x96xbf16>, vector<16x96xf32> -> vector<16x96xf32>
    %c0_3 = arith.constant 0 : index
    %c0_4 = arith.constant 0 : index
    %4 = vector.load %arg2[%c0_3, %c0_4] : memref<1x96xf32, #tpu.memory_space<vmem>>, vector<1x96xf32>
    %5 = vector.broadcast %4 : vector<1x96xf32> to vector<16x96xf32>
    %6 = arith.addf %3, %5 : vector<16x96xf32>
    %7 = vector.extract_strided_slice %6 {offsets = [0, 0], sizes = [16, 32], strides = [1, 1]} : vector<16x96xf32> to vector<16x32xf32>
    %8 = vector.extract_strided_slice %6 {offsets = [0, 32], sizes = [16, 32], strides = [1, 1]} : vector<16x96xf32> to vector<16x32xf32>
    %9 = vector.extract_strided_slice %6 {offsets = [0, 64], sizes = [16, 32], strides = [1, 1]} : vector<16x96xf32> to vector<16x32xf32>
    %10 = tpu.iota {dimensions = array<i32: 0>} : vector<16x128xi32>
    %11 = tpu.iota {dimensions = array<i32: 1>} : vector<16x128xi32>
    %c15_i32 = arith.constant 15 : i32
    %12 = vector.broadcast %c15_i32 : i32 to vector<16x128xi32>
    %13 = arith.andi %11, %12 : vector<16x128xi32>
    %14 = arith.cmpi eq, %13, %10 : vector<16x128xi32>
    %15 = arith.extui %14 : vector<16x128xi1> to vector<16x128xi32>
    %16 = arith.sitofp %15 : vector<16x128xi32> to vector<16x128xf32>
    %17 = arith.truncf %16 : vector<16x128xf32> to vector<16x128xbf16>
    %18 = tpu.transpose %8, [1, 0] : vector<16x32xf32> -> vector<32x16xf32>
    %19 = arith.truncf %18 : vector<32x16xf32> to vector<32x16xbf16>
    %cst_5 = arith.constant dense<0.000000e+00> : vector<32x128xf32>
    %20 = tpu.matmul %19, %17, %cst_5 {dimension_numbers = #tpu.dot_dimension_numbers<[1], [0], [0], [1], [0, 0, 1, 1], [], []>} : vector<32x16xbf16>, vector<16x128xbf16>, vector<32x128xf32> -> vector<32x128xf32>
    %21 = tpu.iota {dimensions = array<i32: 0>} : vector<32x128xi32>
    %22 = tpu.iota {dimensions = array<i32: 1>} : vector<32x128xi32>
    %c2_i32 = arith.constant 2 : i32
    %23 = vector.broadcast %c2_i32 : i32 to vector<32x128xi32>
    %24 = arith.shrsi %21, %23 : vector<32x128xi32>
    %c4_i32 = arith.constant 4 : i32
    %25 = vector.broadcast %c4_i32 : i32 to vector<32x128xi32>
    %26 = arith.shrsi %22, %25 : vector<32x128xi32>
    %27 = arith.cmpi eq, %24, %26 : vector<32x128xi32>
    %cst_6 = arith.constant 0.000000e+00 : f32
    %28 = vector.broadcast %cst_6 : f32 to vector<32x128xf32>
    %29 = arith.select %27, %20, %28 : vector<32x128xi1>, vector<32x128xf32>
    %30 = arith.truncf %29 : vector<32x128xf32> to vector<32x128xbf16>
    %31 = arith.truncf %7 : vector<16x32xf32> to vector<16x32xbf16>
    %cst_7 = arith.constant dense<0.000000e+00> : vector<16x128xf32>
    %32 = tpu.matmul %31, %30, %cst_7 {dimension_numbers = #tpu.dot_dimension_numbers<[1], [0], [0], [1], [0, 0, 1, 1], [], []>} : vector<16x32xbf16>, vector<32x128xbf16>, vector<16x128xf32> -> vector<16x128xf32>
    %33 = tpu.iota {dimensions = array<i32: 0>} : vector<16x128xi32>
    %34 = tpu.iota {dimensions = array<i32: 1>} : vector<16x128xi32>
    %c3_i32 = arith.constant 3 : i32
    %35 = vector.broadcast %c3_i32 : i32 to vector<16x128xi32>
    %36 = arith.shrsi %33, %35 : vector<16x128xi32>
    %c15_i32_8 = arith.constant 15 : i32
    %37 = vector.broadcast %c15_i32_8 : i32 to vector<16x128xi32>
    %38 = arith.andi %34, %37 : vector<16x128xi32>
    %c3_i32_9 = arith.constant 3 : i32
    %39 = vector.broadcast %c3_i32_9 : i32 to vector<16x128xi32>
    %40 = arith.shrsi %38, %39 : vector<16x128xi32>
    %41 = arith.cmpi eq, %36, %40 : vector<16x128xi32>
    %cst_10 = arith.constant -1.000000e+30 : f32
    %42 = vector.broadcast %cst_10 : f32 to vector<16x128xf32>
    %43 = arith.select %41, %32, %42 : vector<16x128xi1>, vector<16x128xf32>
    %cst_11 = arith.constant dense<0xFF800000> : vector<16xf32>
    %44 = vector.multi_reduction <maximumf>, %43, %cst_11 [1] : vector<16x128xf32> to vector<16xf32>
    %45 = vector.shape_cast %44 : vector<16xf32> to vector<16x1xf32>
    %46 = vector.broadcast %45 : vector<16x1xf32> to vector<16x128xf32>
    %47 = arith.subf %43, %46 : vector<16x128xf32>
    %48 = math.exp %47 : vector<16x128xf32>
    %49 = arith.truncf %48 : vector<16x128xf32> to vector<16x128xbf16>
    %50 = tpu.iota {dimensions = array<i32: 0>} : vector<128x32xi32>
    %51 = tpu.iota {dimensions = array<i32: 1>} : vector<128x32xi32>
    %c4_i32_12 = arith.constant 4 : i32
    %52 = vector.broadcast %c4_i32_12 : i32 to vector<128x32xi32>
    %53 = arith.shrsi %50, %52 : vector<128x32xi32>
    %c2_i32_13 = arith.constant 2 : i32
    %54 = vector.broadcast %c2_i32_13 : i32 to vector<128x32xi32>
    %55 = arith.shrsi %51, %54 : vector<128x32xi32>
    %56 = arith.cmpi eq, %53, %55 : vector<128x32xi32>
    %57 = tpu.concatenate %9, %9, %9, %9, %9, %9, %9, %9 in 0 : vector<16x32xf32>, vector<16x32xf32>, vector<16x32xf32>, vector<16x32xf32>, vector<16x32xf32>, vector<16x32xf32>, vector<16x32xf32>, vector<16x32xf32> -> vector<128x32xf32>
    %cst_14 = arith.constant 0.000000e+00 : f32
    %58 = vector.broadcast %cst_14 : f32 to vector<128x32xf32>
    %59 = arith.select %56, %57, %58 : vector<128x32xi1>, vector<128x32xf32>
    %60 = arith.truncf %59 : vector<128x32xf32> to vector<128x32xbf16>
    %61 = arith.extui %56 : vector<128x32xi1> to vector<128x32xi32>
    %62 = arith.sitofp %61 : vector<128x32xi32> to vector<128x32xf32>
    %63 = arith.truncf %62 : vector<128x32xf32> to vector<128x32xbf16>
    %cst_15 = arith.constant dense<0.000000e+00> : vector<16x32xf32>
    %64 = tpu.matmul %49, %60, %cst_15 {dimension_numbers = #tpu.dot_dimension_numbers<[1], [0], [0], [1], [0, 0, 1, 1], [], []>} : vector<16x128xbf16>, vector<128x32xbf16>, vector<16x32xf32> -> vector<16x32xf32>
    %cst_16 = arith.constant dense<0.000000e+00> : vector<16x32xf32>
    %65 = tpu.matmul %49, %63, %cst_16 {dimension_numbers = #tpu.dot_dimension_numbers<[1], [0], [0], [1], [0, 0, 1, 1], [], []>} : vector<16x128xbf16>, vector<128x32xbf16>, vector<16x32xf32> -> vector<16x32xf32>
    %66 = tpu.reciprocal %65 {approx = true} : vector<16x32xf32> -> vector<16x32xf32>
    %67 = arith.mulf %64, %66 : vector<16x32xf32>
    %68 = arith.truncf %67 : vector<16x32xf32> to vector<16x32xbf16>
    %c0_17 = arith.constant 0 : index
    %c0_18 = arith.constant 0 : index
    %69 = vector.load %arg3[%c0_17, %c0_18] : memref<32x32xbf16, #tpu.memory_space<vmem>>, vector<32x32xbf16>
    %cst_19 = arith.constant dense<0.000000e+00> : vector<16x32xf32>
    %70 = tpu.matmul %68, %69, %cst_19 {dimension_numbers = #tpu.dot_dimension_numbers<[1], [0], [0], [1], [0, 0, 1, 1], [], []>} : vector<16x32xbf16>, vector<32x32xbf16>, vector<16x32xf32> -> vector<16x32xf32>
    %c0_20 = arith.constant 0 : index
    %c0_21 = arith.constant 0 : index
    %71 = vector.load %arg4[%c0_20, %c0_21] : memref<1x32xf32, #tpu.memory_space<vmem>>, vector<1x32xf32>
    %72 = vector.broadcast %71 : vector<1x32xf32> to vector<16x32xf32>
    %73 = arith.addf %70, %72 : vector<16x32xf32>
    %c0_22 = arith.constant 0 : index
    %c0_23 = arith.constant 0 : index
    %74 = vector.load %arg5[%c0_22, %c0_23] : memref<16x32xf32, #tpu.memory_space<vmem>>, vector<16x32xf32>
    tpu.vector_store %arg5[%c0_22, %c0_23], %73 {strides = array<i32>} : memref<16x32xf32, #tpu.memory_space<vmem>>, vector<16x32xf32>,
    return
  }
}

</mosaic_0001>

<llo_original>
// kernel: tpu_custom_call.1
$region0: #{tpu_custom_call.1}
  #allocation0 [shape = 'u32[]', space=smem, size = 0x4, offset = 0x4, fixed_abs, tag = 'smem constant byte address 0x4 - core index']
  #allocation1 [shape = 'u32[72,128]{1,0:T(1,128)}', space=vmem, size = 0x9000, scoped, tag = 'internal scratch']
  %s0 = inlined_call_operand.hbm [shape: f32[16,32], index: 0, kind: input, shape index: {}]
  %s1 = inlined_call_operand.hbm [shape: bf16[32,96], index: 1, kind: input, shape index: {}]
  %s2 = inlined_call_operand.vmem [shape: f32[1,96], index: 2, kind: input, shape index: {}]
  %s3 = inlined_call_operand.hbm [shape: bf16[32,32], index: 3, kind: input, shape index: {}]
  %s4 = inlined_call_operand.vmem [shape: f32[1,32], index: 4, kind: input, shape index: {}]
  %s5 = inlined_call_operand.hbm [shape: f32[16,32], index: 5, kind: output, shape index: {}]
  %s6 = sld [smem:[#allocation0]]
  $region42: #{tpu_custom_call.1} parent=0
    _
  %s8 = ssub.s32 1, %s6
  %s9 = scalar_select 0, %s8, %s6
  $region1: #{tpu_custom_call.1} parent=0
    #allocation2 [shape = 'u8[8192]{0}', space=vmem, size = 0x2000, scoped, tag = 'input window, operand 0, single buffered']
    #allocation3 [shape = 's32[1]{0}', space=sflag, size = 0x4, scoped, tag = 'scoped memory for tpu_custom_call.1']
    #allocation4 [shape = 's32[1]{0}', space=sflag, size = 0x4, scoped, tag = 'scoped memory for tpu_custom_call.1']
    #allocation5 [shape = 'u8[8192]{0}', space=vmem, size = 0x2000, scoped, tag = 'input window, operand 1, single buffered']
    #allocation6 [shape = 's32[1]{0}', space=sflag, size = 0x4, scoped, tag = 'scoped memory for tpu_custom_call.1']
    #allocation7 [shape = 'u8[8192]{0}', space=vmem, size = 0x2000, scoped, tag = 'input window, operand 3, single buffered']
    #allocation8 [shape = 'u8[8192]{0}', space=vmem, size = 0x2000, scoped, tag = 'output window, operand 0, single buffered']
    %10 = vsyncpa [#allocation3], 0
    %11 = vsyncpa [#allocation6], 0
    %12 = vsyncpa [#allocation4], 0
    // Predicated region
    $region2: #{tpu_custom_call.1} parent=1 // pred_check
      _
    $region3: #{tpu_custom_call.1} parent=1 // pred_check_branch
      %14 = sbr.rel (0) target = $region5
    $region4: #{tpu_custom_call.1} parent=1 // pred_region
      %16 = vsyncadd [#allocation3], 0
      %s17 = sshll.u32 %s0, 4
      %s18 = int_to_ptr.hbm [resolvable:$true] %s17
      %s19 = sshll.u32 [#allocation2], 4
      %s20 = int_to_ptr.vmem [resolvable:$true] %s19
      %25 = dma.hbm_to_vmem [thread:$0]  %s18, 256, %s20, [#allocation3], 128, 128, 8
    $region5: #{tpu_custom_call.1} parent=1 // pred_fallthru
      _
    // Predicated region
    $region6: #{tpu_custom_call.1} parent=1 // pred_check
      _
    $region7: #{tpu_custom_call.1} parent=1 // pred_check_branch
      %27 = sbr.rel (0) target = $region9
    $region8: #{tpu_custom_call.1} parent=1 // pred_region
      %29 = vsyncadd [#allocation6], 0
      %s30 = sshll.u32 %s1, 4
      %s31 = int_to_ptr.hbm [resolvable:$true] %s30
      %s32 = sshll.u32 [#allocation5], 4
      %s33 = int_to_ptr.vmem [resolvable:$true] %s32
      %38 = dma.hbm_to_vmem [thread:$0]  %s31, 256, %s33, [#allocation6], 64, 64, 4
    $region9: #{tpu_custom_call.1} parent=1 // pred_fallthru
      _
    // Predicated region
    $region10: #{tpu_custom_call.1} parent=1 // pred_check
      _
    $region11: #{tpu_custom_call.1} parent=1 // pred_check_branch
      %40 = sbr.rel (0) target = $region13
    $region12: #{tpu_custom_call.1} parent=1 // pred_region
      _
    $region13: #{tpu_custom_call.1} parent=1 // pred_fallthru
      _
    // Predicated region
    $region14: #{tpu_custom_call.1} parent=1 // pred_check
      _
    $region15: #{tpu_custom_call.1} parent=1 // pred_check_branch
      %42 = sbr.rel (0) target = $region17
    $region16: #{tpu_custom_call.1} parent=1 // pred_region
      %44 = vsyncadd [#allocation6], 0
      %s45 = sshll.u32 %s3, 4
      %s46 = int_to_ptr.hbm [resolvable:$true] %s45
      %s47 = sshll.u32 [#allocation7], 4
      %s48 = int_to_ptr.vmem [resolvable:$true] %s47
      %53 = dma.hbm_to_vmem [thread:$0]  %s46, 256, %s48, [#allocation6], 64, 64, 4
    $region17: #{tpu_custom_call.1} parent=1 // pred_fallthru
      _
    // Predicated region
    $region18: #{tpu_custom_call.1} parent=1 // pred_check
      _
    $region19: #{tpu_custom_call.1} parent=1 // pred_check_branch
      %55 = sbr.rel (0) target = $region21
    $region20: #{tpu_custom_call.1} parent=1 // pred_region
      _
    $region21: #{tpu_custom_call.1} parent=1 // pred_fallthru
      _
    // Predicated region
    $region22: #{tpu_custom_call.1} parent=1 // pred_check
      _
    $region23: #{tpu_custom_call.1} parent=1 // pred_check_branch
      %57 = sbr.rel (0) target = $region25
    $region24: #{tpu_custom_call.1} parent=1 // pred_region
      %59 = dma.done [#allocation3], 256
    $region25: #{tpu_custom_call.1} parent=1 // pred_fallthru
      _
    // Predicated region
    $region26: #{tpu_custom_call.1} parent=1 // pred_check
      _
    $region27: #{tpu_custom_call.1} parent=1 // pred_check_branch
      %61 = sbr.rel (0) target = $region29
    $region28: #{tpu_custom_call.1} parent=1 // pred_region
      %63 = dma.done [#allocation6], 256
    $region29: #{tpu_custom_call.1} parent=1 // pred_fallthru
      _
    // Predicated region
    $region30: #{tpu_custom_call.1} parent=1 // pred_check
      _
    $region31: #{tpu_custom_call.1} parent=1 // pred_check_branch
      %65 = sbr.rel (0) target = $region33
    $region32: #{tpu_custom_call.1} parent=1 // pred_region
      %67 = dma.done [#allocation6], 256
    $region33: #{tpu_custom_call.1} parent=1 // pred_fallthru
      _
    %v69 = vld [vmem:[#allocation2] sm:$0xff]
    %v70 = vld [vmem:[#allocation2 + $0x8] sm:$0xff]
    %v71 = vpack.c.bf16 %v70, %v69
    %v72 = vld [vmem:[#allocation5] sm:$0xf]
    %v73 = vld [vmem:[#allocation5 + $0x4] sm:$0xf]
    %v74 = vld [vmem:[#allocation5 + $0x8] sm:$0xf]
    %v75 = vld [vmem:[#allocation5 + $0xc] sm:$0xf]
    %v76 = vld [vmem:[%s2] sm:$0x1]
    %v78 = vperm.slane %v76, 0
    %v84 = vunpack.c.l.b16 %v72
    %v85 = vunpack.c.l.b16 %v73
    %v86 = vunpack.c.l.b16 %v74
    %v87 = vunpack.c.l.b16 %v75
    %v88 = vpack.c.b16 %v85, %v84
    %v89 = vpack.c.b16 %v87, %v86
    %vm92 = vcmask 261120
    %v94 = vsel %vm92, %v71, 0
    %96 = vmatpush.bf16.msra.mxu0 0
    %97 = vmatpush.bf16.msra.mxu0 0
    %98 = vmatpush.bf16.msra.mxu0 0
    %99 = vmatpush.bf16.msra.mxu0 0
    %100 = vmatpush.bf16.msra.mxu0 0
    %101 = vmatpush.bf16.msra.mxu0 0
    %102 = vmatpush.bf16.msra.mxu0 %v89
    %103 = vmatpush.bf16.msra.mxu0 %v88
    %104 = vmatmul.bf16.gmra.mxu0 %v94
    %v105 = vpop.f32.mrf.mxu0
    %v106 = vadd.f32 %v78, %v105
    %v107 = vpop.f32.mrf.mxu0
    %v108 = vadd.f32 %v78, %v107
    %109 = vdwg.mxu0
    %v110 = vlaneseq
    %v111 = vshrl.u32 %v110, 7
    %v112 = vadd.s32 %v111, 8
    %v113 = vlaneseq
    %v114 = vand.u32 %v113, 127
    %v115 = vand.u32 %v114, 15
    %vm116 = vcmp.eq.s32.totalorder %v115, %v111
    %vm117 = vcmp.eq.s32.totalorder %v115, %v112
    %v118 = vsel %vm116, 1, 0
    %v119 = vsel %vm117, 1, 0
    %v120 = vcvt.s32.f32 %v118
    %v121 = vcvt.s32.f32 %v119
    %v122 = vpack.c.bf16 %v121, %v120
    %125 = vrot.lane.b32.xlu0 %v106, 96
    %v126 = vpop.permute.xlu0 %125
    %127 = vrot.lane.b32.xlu0 %v108, 96
    %v128 = vpop.permute.xlu0 %127
    %131 = vxpose.xlu0.b32.start [1/16] %v126, 128
    %132 = vxpose.xlu0.b32.cont [2/16] %v128, 128
    %133 = vxpose.xlu0.b32.cont [3/16] 0.0, 128
    %134 = vxpose.xlu0.b32.cont [4/16] 0.0, 128
    %135 = vxpose.xlu0.b32.cont [5/16] 0.0, 128
    %136 = vxpose.xlu0.b32.cont [6/16] 0.0, 128
    %137 = vxpose.xlu0.b32.cont [7/16] 0.0, 128
    %138 = vxpose.xlu0.b32.cont [8/16] 0.0, 128
    %139 = vxpose.xlu0.b32.cont [9/16] 0.0, 128
    %140 = vxpose.xlu0.b32.cont [10/16] 0.0, 128
    %141 = vxpose.xlu0.b32.cont [11/16] 0.0, 128
    %142 = vxpose.xlu0.b32.cont [12/16] 0.0, 128
    %143 = vxpose.xlu0.b32.cont [13/16] 0.0, 128
    %144 = vxpose.xlu0.b32.cont [14/16] 0.0, 128
    %145 = vxpose.xlu0.b32.cont [15/16] 0.0, 128
    %146 = vxpose.xlu0.b32.end [16/16] 0.0, 128
    %v147 = vpop.trf.xlu0
    %v148 = vpop.trf.xlu0
    %v149 = vpop.trf.xlu0
    %v150 = vpop.trf.xlu0
    %v151 = vpop.trf.xlu0
    %v152 = vpop.trf.xlu0
    %v153 = vpop.trf.xlu0
    %v154 = vpop.trf.xlu0
    %v155 = vpop.trf.xlu0
    %v156 = vpop.trf.xlu0
    %v157 = vpop.trf.xlu0
    %v158 = vpop.trf.xlu0
    %v159 = vpop.trf.xlu0
    %v160 = vpop.trf.xlu0
    %v161 = vpop.trf.xlu0
    %v162 = vpop.trf.xlu0
    %v163 = vpack.c.bf16 %v148, %v147
    %v164 = vpack.c.bf16 %v150, %v149
    %vm165 = vcmask 130048
    %v167 = vsel %vm165, %v163, 0
    %v170 = vsel %vm165, %v164, 0
    %172 = vmatpush.bf16.msra.mxu0 0
    %173 = vmatpush.bf16.msra.mxu0 0
    %174 = vmatpush.bf16.msra.mxu0 0
    %175 = vmatpush.bf16.msra.mxu0 0
    %176 = vmatpush.bf16.msra.mxu0 0
    %177 = vmatpush.bf16.msra.mxu0 0
    %178 = vmatpush.bf16.msra.mxu0 0
    %179 = vmatpush.bf16.msra.mxu0 %v122
    %180 = vmatmul.bf16.gmra.mxu0 %v167
    %v181 = vpop.f32.mrf.mxu0
    %v182 = vadd.f32 0.0, %v181
    %v183 = vpop.f32.mrf.mxu0
    %v184 = vadd.f32 0.0, %v183
    %185 = vmatmul.bf16.gmra.mxu0 %v170
    %v186 = vpop.f32.mrf.mxu0
    %v187 = vadd.f32 0.0, %v186
    %v188 = vpop.f32.mrf.mxu0
    %v189 = vadd.f32 0.0, %v188
    %190 = vdwg.mxu0
    %v191 = vadd.s32 %v111, 16
    %v192 = vadd.s32 %v111, 24
    %v193 = vshra.s32 %v111, 2
    %v194 = vshra.s32 %v112, 2
    %v195 = vshra.s32 %v191, 2
    %v196 = vshra.s32 %v192, 2
    %v197 = vshra.s32 %v114, 4
    %vm198 = vcmp.eq.s32.totalorder %v193, %v197
    %vm199 = vcmp.eq.s32.totalorder %v194, %v197
    %vm200 = vcmp.eq.s32.totalorder %v195, %v197
    %vm201 = vcmp.eq.s32.totalorder %v196, %v197
    %v202 = vsel %vm198, %v182, 0.0
    %v203 = vsel %vm199, %v184, 0.0
    %v204 = vsel %vm200, %v187, 0.0
    %v205 = vsel %vm201, %v189, 0.0
    %v206 = vpack.c.bf16 %v203, %v202
    %v207 = vpack.c.bf16 %v205, %v204
    %v208 = vpack.c.bf16 %v108, %v106
    %v210 = vsel %vm92, %v208, 0
    %212 = vmatpush.bf16.msra.mxu0 0
    %213 = vmatpush.bf16.msra.mxu0 0
    %214 = vmatpush.bf16.msra.mxu0 0
    %215 = vmatpush.bf16.msra.mxu0 0
    %216 = vmatpush.bf16.msra.mxu0 0
    %217 = vmatpush.bf16.msra.mxu0 0
    %218 = vmatpush.bf16.msra.mxu0 %v207
    %219 = vmatpush.bf16.msra.mxu0 %v206
    %220 = vmatmul.bf16.gmra.mxu0 %v210
    %v221 = vpop.f32.mrf.mxu0
    %v222 = vadd.f32 0.0, %v221
    %v223 = vpop.f32.mrf.mxu0
    %v224 = vadd.f32 0.0, %v223
    %225 = vdwg.mxu0
    %v226 = vshra.s32 %v111, 3
    %v227 = vshra.s32 %v112, 3
    %v228 = vshra.s32 %v115, 3
    %vm229 = vcmp.eq.s32.totalorder %v226, %v228
    %vm230 = vcmp.eq.s32.totalorder %v227, %v228
    %v231 = vsel %vm229, %v222, -1e+30
    %v232 = vsel %vm230, %v224, -1e+30
    %233 = vmax.xlane.f32.xlu0 %v231
    %v234 = vpop.xlane.xlu0 %233
    %235 = vmax.xlane.f32.xlu0 %v232
    %v236 = vpop.xlane.xlu0 %235
    %v237 = vsub.f32 %v231, %v234
    %v238 = vsub.f32 %v232, %v236
    %v239 = vmul.f32 %v237, 1.442695
    %v240 = vpow.pop %v239
    %v241 = vmul.f32 %v238, 1.442695
    %v242 = vpow.pop %v241
    %v243 = vpack.c.bf16 %v242, %v240
    %v244 = vadd.s32 %v111, 32
    %v245 = vadd.s32 %v111, 40
    %v246 = vadd.s32 %v111, 48
    %v247 = vadd.s32 %v111, 56
    %v248 = vadd.s32 %v111, 64
    %v249 = vadd.s32 %v111, 72
    %v250 = vadd.s32 %v111, 80
    %v251 = vadd.s32 %v111, 88
    %v252 = vadd.s32 %v111, 96
    %v253 = vadd.s32 %v111, 104
    %v254 = vadd.s32 %v111, 112
    %v255 = vadd.s32 %v111, 120
    %v256 = vshra.s32 %v111, 4
    %v257 = vshra.s32 %v112, 4
    %v258 = vshra.s32 %v191, 4
    %v259 = vshra.s32 %v192, 4
    %v260 = vshra.s32 %v244, 4
    %v261 = vshra.s32 %v245, 4
    %v262 = vshra.s32 %v246, 4
    %v263 = vshra.s32 %v247, 4
    %v264 = vshra.s32 %v248, 4
    %v265 = vshra.s32 %v249, 4
    %v266 = vshra.s32 %v250, 4
    %v267 = vshra.s32 %v251, 4
    %v268 = vshra.s32 %v252, 4
    %v269 = vshra.s32 %v253, 4
    %v270 = vshra.s32 %v254, 4
    %v271 = vshra.s32 %v255, 4
    %v272 = vshra.s32 %v114, 2
    %vm273 = vcmp.eq.s32.totalorder %v256, %v272
    %vm274 = vcmp.eq.s32.totalorder %v257, %v272
    %vm275 = vcmp.eq.s32.totalorder %v258, %v272
    %vm276 = vcmp.eq.s32.totalorder %v259, %v272
    %vm277 = vcmp.eq.s32.totalorder %v260, %v272
    %vm278 = vcmp.eq.s32.totalorder %v261, %v272
    %vm279 = vcmp.eq.s32.totalorder %v262, %v272
    %vm280 = vcmp.eq.s32.totalorder %v263, %v272
    %vm281 = vcmp.eq.s32.totalorder %v264, %v272
    %vm282 = vcmp.eq.s32.totalorder %v265, %v272
    %vm283 = vcmp.eq.s32.totalorder %v266, %v272
    %vm284 = vcmp.eq.s32.totalorder %v267, %v272
    %vm285 = vcmp.eq.s32.totalorder %v268, %v272
    %vm286 = vcmp.eq.s32.totalorder %v269, %v272
    %vm287 = vcmp.eq.s32.totalorder %v270, %v272
    %vm288 = vcmp.eq.s32.totalorder %v271, %v272
    %289 = vrot.lane.b32.xlu0 %v106, 64
    %v290 = vpop.permute.xlu0 %289
    %291 = vrot.lane.b32.xlu0 %v108, 64
    %v292 = vpop.permute.xlu0 %291
    %v295 = vsel %vm273, %v290, 0.0
    %v296 = vsel %vm274, %v292, 0.0
    %v297 = vsel %vm275, %v290, 0.0
    %v298 = vsel %vm276, %v292, 0.0
    %v299 = vsel %vm277, %v290, 0.0
    %v300 = vsel %vm278, %v292, 0.0
    %v301 = vsel %vm279, %v290, 0.0
    %v302 = vsel %vm280, %v292, 0.0
    %v303 = vsel %vm281, %v290, 0.0
    %v304 = vsel %vm282, %v292, 0.0
    %v305 = vsel %vm283, %v290, 0.0
    %v306 = vsel %vm284, %v292, 0.0
    %v307 = vsel %vm285, %v290, 0.0
    %v308 = vsel %vm286, %v292, 0.0
    %v309 = vsel %vm287, %v290, 0.0
    %v310 = vsel %vm288, %v292, 0.0
    %v311 = vpack.c.bf16 %v296, %v295
    %v312 = vpack.c.bf16 %v298, %v297
    %v313 = vpack.c.bf16 %v300, %v299
    %v314 = vpack.c.bf16 %v302, %v301
    %v315 = vpack.c.bf16 %v304, %v303
    %v316 = vpack.c.bf16 %v306, %v305
    %v317 = vpack.c.bf16 %v308, %v307
    %v318 = vpack.c.bf16 %v310, %v309
    %v319 = vsel %vm273, 1, 0
    %v320 = vsel %vm274, 1, 0
    %v321 = vsel %vm275, 1, 0
    %v322 = vsel %vm276, 1, 0
    %v323 = vsel %vm277, 1, 0
    %v324 = vsel %vm278, 1, 0
    %v325 = vsel %vm279, 1, 0
    %v326 = vsel %vm280, 1, 0
    %v327 = vsel %vm281, 1, 0
    %v328 = vsel %vm282, 1, 0
    %v329 = vsel %vm283, 1, 0
    %v330 = vsel %vm284, 1, 0
    %v331 = vsel %vm285, 1, 0
    %v332 = vsel %vm286, 1, 0
    %v333 = vsel %vm287, 1, 0
    %v334 = vsel %vm288, 1, 0
    %v335 = vcvt.s32.f32 %v319
    %v336 = vcvt.s32.f32 %v320
    %v337 = vcvt.s32.f32 %v321
    %v338 = vcvt.s32.f32 %v322
    %v339 = vcvt.s32.f32 %v323
    %v340 = vcvt.s32.f32 %v324
    %v341 = vcvt.s32.f32 %v325
    %v342 = vcvt.s32.f32 %v326
    %v343 = vcvt.s32.f32 %v327
    %v344 = vcvt.s32.f32 %v328
    %v345 = vcvt.s32.f32 %v329
    %v346 = vcvt.s32.f32 %v330
    %v347 = vcvt.s32.f32 %v331
    %v348 = vcvt.s32.f32 %v332
    %v349 = vcvt.s32.f32 %v333
    %v350 = vcvt.s32.f32 %v334
    %v351 = vpack.c.bf16 %v336, %v335
    %v352 = vpack.c.bf16 %v338, %v337
    %v353 = vpack.c.bf16 %v340, %v339
    %v354 = vpack.c.bf16 %v342, %v341
    %v355 = vpack.c.bf16 %v344, %v343
    %v356 = vpack.c.bf16 %v346, %v345
    %v357 = vpack.c.bf16 %v348, %v347
    %v358 = vpack.c.bf16 %v350, %v349
    %359 = vmatpush.bf16.msra.mxu0 %v318
    %360 = vmatpush.bf16.msra.mxu0 %v317
    %361 = vmatpush.bf16.msra.mxu0 %v316
    %362 = vmatpush.bf16.msra.mxu0 %v315
    %363 = vmatpush.bf16.msra.mxu0 %v314
    %364 = vmatpush.bf16.msra.mxu0 %v313
    %365 = vmatpush.bf16.msra.mxu0 %v312
    %366 = vmatpush.bf16.msra.mxu0 %v311
    %367 = vmatmul.bf16.gmra.mxu0 %v243
    %v368 = vpop.f32.mrf.mxu0
    %v369 = vadd.f32 0.0, %v368
    %v370 = vpop.f32.mrf.mxu0
    %v371 = vadd.f32 0.0, %v370
    %372 = vdwg.mxu0
    %373 = vmatpush.bf16.msra.mxu0 %v358
    %374 = vmatpush.bf16.msra.mxu0 %v357
    %375 = vmatpush.bf16.msra.mxu0 %v356
    %376 = vmatpush.bf16.msra.mxu0 %v355
    %377 = vmatpush.bf16.msra.mxu0 %v354
    %378 = vmatpush.bf16.msra.mxu0 %v353
    %379 = vmatpush.bf16.msra.mxu0 %v352
    %380 = vmatpush.bf16.msra.mxu0 %v351
    %381 = vmatmul.bf16.gmra.mxu0 %v243
    %v382 = vpop.f32.mrf.mxu0
    %v383 = vadd.f32 0.0, %v382
    %v384 = vpop.f32.mrf.mxu0
    %v385 = vadd.f32 0.0, %v384
    %386 = vdwg.mxu0
    %v387 = vrcp.pop %v383
    %v388 = vrcp.pop %v385
    %v389 = vmul.f32 %v369, %v387
    %v390 = vmul.f32 %v371, %v388
    %v391 = vpack.c.bf16 %v390, %v389
    %v392 = vld [vmem:[#allocation7] sm:$0xf]
    %v393 = vld [vmem:[#allocation7 + $0x4] sm:$0xf]
    %v394 = vld [vmem:[#allocation7 + $0x8] sm:$0xf]
    %v395 = vld [vmem:[#allocation7 + $0xc] sm:$0xf]
    %v396 = vld [vmem:[%s4] sm:$0x1]
    %v398 = vperm.slane %v396, 0
    %v404 = vunpack.c.l.b16 %v392
    %v405 = vunpack.c.l.b16 %v393
    %v406 = vunpack.c.l.b16 %v394
    %v407 = vunpack.c.l.b16 %v395
    %v408 = vpack.c.b16 %v405, %v404
    %v409 = vpack.c.b16 %v407, %v406
    %v413 = vsel %vm92, %v391, 0
    %415 = vmatpush.bf16.msra.mxu0 0
    %416 = vmatpush.bf16.msra.mxu0 0
    %417 = vmatpush.bf16.msra.mxu0 0
    %418 = vmatpush.bf16.msra.mxu0 0
    %419 = vmatpush.bf16.msra.mxu0 0
    %420 = vmatpush.bf16.msra.mxu0 0
    %421 = vmatpush.bf16.msra.mxu0 %v409
    %422 = vmatpush.bf16.msra.mxu0 %v408
    %423 = vmatmul.bf16.gmra.mxu0 %v413
    %v424 = vpop.f32.mrf.mxu0
    %v425 = vadd.f32 %v398, %v424
    %v426 = vpop.f32.mrf.mxu0
    %v427 = vadd.f32 %v398, %v426
    %428 = vdwg.mxu0
    %429 = vst.msk [vmem:[#allocation8] sm:$0xff] %vm92, %v425
    %430 = vst.msk [vmem:[#allocation8 + $0x8] sm:$0xff] %vm92, %v427
    // Predicated region
    $region34: #{tpu_custom_call.1} parent=1 // pred_check
      _
    $region35: #{tpu_custom_call.1} parent=1 // pred_check_branch
      %432 = sbr.rel (0) target = $region37
    $region36: #{tpu_custom_call.1} parent=1 // pred_region
      %434 = vsyncadd [#allocation4], 0
      %s435 = sshll.u32 [#allocation8], 4
      %s436 = int_to_ptr.vmem [resolvable:$true] %s435
      %s437 = sshll.u32 %s5, 4
      %s438 = int_to_ptr.hbm [resolvable:$true] %s437
      %443 = dma.vmem_to_hbm [thread:$0]  %s436, 256, %s438, [#allocation4], 128, 128, 8
    $region37: #{tpu_custom_call.1} parent=1 // pred_fallthru
      _
    // Predicated region
    $region38: #{tpu_custom_call.1} parent=1 // pred_check
      _
    $region39: #{tpu_custom_call.1} parent=1 // pred_check_branch
      %445 = sbr.rel (0) target = $region41
    $region40: #{tpu_custom_call.1} parent=1 // pred_region
      %447 = dma.done [#allocation4], 256
    $region41: #{tpu_custom_call.1} parent=1 // pred_fallthru
      _
    %448 = vsyncpa [#allocation3], 1
    %449 = vsyncpa [#allocation6], 1
    %450 = vsyncpa [#allocation4], 1

</llo_original>
